<compile_context>
chip_gen: v5e
topology: v5e:2x2
jax: 0.10.0
libtpu: 0.0.40
codegen_flags: <defaults>
</compile_context>

<pallas_src>
import math
from functools import partial

import jax
import jax.numpy as jnp
from jax.experimental import pallas as pl
from jax.experimental.pallas import tpu as pltpu


def _vmem_limit_bytes():
    """Per-generation VMEM budget: ~100 MiB on 128 MiB parts (v5e/v6e), ~56 MiB on v7x."""
    try:
        cap = int(pltpu.get_tpu_info().vmem_capacity_bytes)
    except Exception:
        cap = 128 * 1024 * 1024
    return max(32 * 1024 * 1024, min(cap - 8 * 1024 * 1024, 100 * 1024 * 1024))


def _pick_block_batch(B, S, target_rows=256):
    """Largest divisor Bt of B with Bt*S <= target_rows, keeping grid extent >= 2 when B >= 2."""
    best = 1
    for bt in range(1, B + 1):
        if B % bt != 0:
            continue
        if bt * S > target_rows and bt != 1:
            continue
        if B >= 2 and B // bt < 2:
            continue
        best = bt
    return best


def _causal_sa_kernel(x_ref,
                      wqkv_ref, woh_ref, bo_ref,
                      g1_ref, be1_ref,
                      w1_ref, bm1_ref, w2_ref, bm2_ref,
                      g2_ref, be2_ref,
                      o_ref,
                      *, seq_len, num_heads, dk, activation, approx_recip):
    M, D = x_ref.shape                      # M = Bt * S rows (sublanes), D on lanes
    S = seq_len
    H = num_heads
    Bt = M // S

    x = x_ref[...].astype(jnp.float32)      # (M, D) f32 — residual / LN math in f32
    x_bf = x.astype(jnp.bfloat16)           # bf16 MXU operand

    # --- fused QKV: one (M, D) @ (D, 3D) bf16 matmul, f32 accumulation ---
    qkv = jnp.dot(x_bf, wqkv_ref[...], preferred_element_type=jnp.float32)   # (M, 3D) f32

    # scale folded into q before the bf16 cast (O(M*D) instead of O(H*S^2) multiplies)
    scale = jnp.float32(1.0 / math.sqrt(dk))
    q_bf = (qkv[:, :D] * scale).astype(jnp.bfloat16)
    k_bf = qkv[:, D:2 * D].astype(jnp.bfloat16)
    v_bf = qkv[:, 2 * D:].astype(jnp.bfloat16)

    # Causal mask generated in-kernel (no (S,S) operand, no mask DMA / VMEM).
    row = jax.lax.broadcasted_iota(jnp.int32, (S, S), 0)
    col = jax.lax.broadcasted_iota(jnp.int32, (S, S), 1)
    neg = jnp.where(col > row, jnp.float32(-1e30), jnp.float32(0.0))         # (S, S)

    wo_h = woh_ref[...]                                                      # (H, dk, D) bf16

    attn_rows = []
    for b in range(Bt):                      # static unrolled loop over batch rows in the tile
        r0 = b * S

        def heads(t):                        # (M, D) bf16 -> (H, S, dk) bf16 for this row
            return jnp.stack(
                [t[r0:r0 + S, h * dk:(h + 1) * dk] for h in range(H)], axis=0)

        qh, kh, vh = heads(q_bf), heads(k_bf), heads(v_bf)

        s = jnp.einsum('hqd,hkd->hqk', qh, kh,
                       preferred_element_type=jnp.float32)                   # (H, S, S) f32
        s = s + neg
        s = s - jnp.max(s, axis=-1, keepdims=True)
        p = jnp.exp(s)
        denom = jnp.sum(p, axis=-1, keepdims=True)
        if approx_recip:
            p = p * pl.reciprocal(denom, approx=True)                        # EUP slot, ~free
        else:
            p = p / denom
        p = p.astype(jnp.bfloat16)           # single bf16 cast of the score-sized tensor

        ctx = jnp.einsum('hqk,hkd->hqd', p, vh,
                         preferred_element_type=jnp.float32)                 # (H, S, dk) f32
        ctx_bf = ctx.astype(jnp.bfloat16)    # single cast before the output projection

        # Heads folded into the output projection: accumulate per-head MXU calls into one
        # (S, D) f32 accumulator — no (H, S, D) f32 intermediate, no post-hoc VALU tree sum.
        acc = jnp.zeros((S, D), jnp.float32)
        for h in range(H):
            acc = acc + jnp.dot(ctx_bf[h], wo_h[h],
                                preferred_element_type=jnp.float32)
        attn_rows.append(acc)

    attn = attn_rows[0] if Bt == 1 else jnp.concatenate(attn_rows, axis=0)   # (M, D) f32
    attn = attn + bo_ref[...]

    # --- res1: LayerNorm(x + attn) (f32) ---
    h1 = x + attn
    mu1 = jnp.mean(h1, axis=-1, keepdims=True)
    var1 = jnp.mean((h1 - mu1) ** 2, axis=-1, keepdims=True)
    x1 = (h1 - mu1) * jax.lax.rsqrt(var1 + 1e-5) * g1_ref[...] + be1_ref[...]

    # --- MLP: bf16 matmul operands, f32 activation math ---
    z = jnp.dot(x1.astype(jnp.bfloat16), w1_ref[...],
                preferred_element_type=jnp.float32) + bm1_ref[...]
    if activation == 'gelu':
        # GELU with tanh approximation (matches nn.GELU(approximate='tanh'))
        z = 0.5 * z * (1.0 + jnp.tanh(0.7978845608028654 * (z + 0.044715 * z * z * z)))
    else:
        z = jnp.maximum(z, 0.0)
    mlp = jnp.dot(z.astype(jnp.bfloat16), w2_ref[...],
                  preferred_element_type=jnp.float32) + bm2_ref[...]

    # --- res2: LayerNorm(x1 + mlp) (f32) ---
    h2 = x1 + mlp
    mu2 = jnp.mean(h2, axis=-1, keepdims=True)
    var2 = jnp.mean((h2 - mu2) ** 2, axis=-1, keepdims=True)
    out = (h2 - mu2) * jax.lax.rsqrt(var2 + 1e-5) * g2_ref[...] + be2_ref[...]

    o_ref[...] = out.astype(o_ref.dtype)


def causal_sa_layer(x, params, *, num_heads, activation='gelu',
                    pre_norm=False, dropout=0.0, key_padding_mask=None,
                    approx_softmax_recip=True, block_batch=None):
    """x: (B, S, D) float32; params hold (in_dim, out_dim) weights and (1, dim) biases."""
    if pre_norm:
        raise NotImplementedError("TODO(synk): pre_norm=True (PreNormLogic) not implemented.")
    if dropout != 0.0:
        raise NotImplementedError("TODO(synk): dropout>0 (training mode) not implemented.")
    if key_padding_mask is not None:
        raise NotImplementedError("TODO(synk): key_padding_mask merging not implemented.")
    assert activation in ('gelu', 'relu')

    B, S, D = x.shape
    F = params['w1'].shape[1]
    dk = D // num_heads
    assert dk * num_heads == D, "d_model must be a multiple of num_heads"

    Bt = block_batch if block_batch is not None else _pick_block_batch(B, S)
    assert B % Bt == 0

    bf = jnp.bfloat16
    f32 = lambda a: a.astype(jnp.float32)
    # Fused QKV weight (one DMA / one VMEM buffer pair); per-head view of Wo; bf16 operands.
    wqkv = jnp.concatenate([params['wq'], params['wk'], params['wv']], axis=1).astype(bf)
    wo_h = params['wo'].reshape(num_heads, dk, D).astype(bf)
    w1 = params['w1'].astype(bf)
    w2 = params['w2'].astype(bf)
    bo, g1, be1 = f32(params['bo']), f32(params['g1']), f32(params['be1'])
    bm1, bm2 = f32(params['bm1']), f32(params['bm2'])
    g2, be2 = f32(params['g2']), f32(params['be2'])

    # Fold (B, S) onto sublanes, keep D on lanes; each grid step works on Bt*S rows.
    x2d = x.reshape(B * S, D)
    Mb = Bt * S

    full = lambda shape: pl.BlockSpec(shape, lambda i: (0,) * len(shape))

    kernel = partial(_causal_sa_kernel, seq_len=S, num_heads=num_heads, dk=dk,
                     activation=activation, approx_recip=approx_softmax_recip)

    out2d = pl.pallas_call(
        kernel,
        out_shape=jax.ShapeDtypeStruct((B * S, D), x.dtype),
        grid_spec=pltpu.PrefetchScalarGridSpec(
            num_scalar_prefetch=0,
            grid=(B // Bt,),
            in_specs=[
                pl.BlockSpec((Mb, D), lambda i: (i, 0)),       # x row tile (Bt*S, D)
                full((D, 3 * D)),                              # fused Wqkv (bf16)
                full((num_heads, dk, D)), full((1, D)),        # Wo per-head (bf16), bo
                full((1, D)), full((1, D)),                    # ln1 gamma, beta
                full((D, F)), full((1, F)),                    # W1 (bf16), b1
                full((F, D)), full((1, D)),                    # W2 (bf16), b2
                full((1, D)), full((1, D)),                    # ln2 gamma, beta
            ],
            out_specs=pl.BlockSpec((Mb, D), lambda i: (i, 0)),
        ),
        compiler_params=pltpu.CompilerParams(
            dimension_semantics=("parallel",),
            vmem_limit_bytes=_vmem_limit_bytes()),
    )(x2d, wqkv, wo_h, bo, g1, be1, w1, bm1, w2, bm2, g2, be2)

    return out2d.reshape(B, S, D)


def _ref_forward(x, causal_mask, params, num_heads, activation='gelu'):
    """Pure-JAX f32 reference of the PostNorm CausalSALayer forward."""
    B, S, D = x.shape
    dk = D // num_heads
    q = x @ params['wq']
    k = x @ params['wk']
    v = x @ params['wv']
    q = q.reshape(B, S, num_heads, dk).transpose(0, 2, 1, 3)
    k = k.reshape(B, S, num_heads, dk).transpose(0, 2, 1, 3)
    v = v.reshape(B, S, num_heads, dk).transpose(0, 2, 1, 3)
    s = jnp.einsum('bhqd,bhkd->bhqk', q, k) / math.sqrt(dk) + causal_mask[None, None]
    p = jax.nn.softmax(s, axis=-1)
    msg = jnp.einsum('bhqk,bhkd->bhqd', p, v).transpose(0, 2, 1, 3).reshape(B, S, D)
    attn = msg @ params['wo'] + params['bo'][0]

    def ln(h, g, b):
        mu = jnp.mean(h, -1, keepdims=True)
        var = jnp.mean((h - mu) ** 2, -1, keepdims=True)
        return (h - mu) / jnp.sqrt(var + 1e-5) * g[0] + b[0]

    x1 = ln(x + attn, params['g1'], params['be1'])
    z = x1 @ params['w1'] + params['bm1'][0]
    if activation == 'gelu':
        z = 0.5 * z * (1.0 + jnp.tanh(0.7978845608028654 * (z + 0.044715 * z ** 3)))
    else:
        z = jnp.maximum(z, 0.0)
    mlp_out = z @ params['w2'] + params['bm2'][0]
    return ln(x1 + mlp_out, params['g2'], params['be2'])


if __name__ == "__main__":
    B, S, D, H, F = 2, 8, 32, 4, 64   # batch, seq, d_model, num_heads, ffn_hidden

    key = jax.random.PRNGKey(0)
    keys = jax.random.split(key, 10)

    def init(k, shape, fan_in):
        return (jax.random.uniform(k, shape, jnp.float32, -1.0, 1.0) / math.sqrt(fan_in))

    params = {
        'wq': init(keys[0], (D, D), D),
        'wk': init(keys[1], (D, D), D),
        'wv': init(keys[2], (D, D), D),
        'wo': init(keys[3], (D, D), D),
        'bo': init(keys[4], (1, D), D),
        'g1': jnp.ones((1, D), jnp.float32),
        'be1': jnp.zeros((1, D), jnp.float32),
        'w1': init(keys[5], (D, F), D),
        'bm1': init(keys[6], (1, F), D),
        'w2': init(keys[7], (F, D), F),
        'bm2': init(keys[8], (1, D), F),
        'g2': jnp.ones((1, D), jnp.float32),
        'be2': jnp.zeros((1, D), jnp.float32),
    }

    x = jax.random.normal(keys[9], (B, S, D), jnp.float32)

    out = causal_sa_layer(x, params, num_heads=H, activation='gelu')
    out = jax.block_until_ready(out)

    # Reference (pure-JAX, f32, explicit additive causal mask).
    row = jnp.arange(S)[:, None]
    col = jnp.arange(S)[None, :]
    causal_mask = jnp.where(col > row, -1e30, 0.0).astype(jnp.float32)
    ref = _ref_forward(x, causal_mask, params, H, activation='gelu')

    # Tolerance accounts for bf16 MXU operands (f32 accumulation) and the EUP
    # approximate reciprocal in the softmax denominator.
    err = float(jnp.max(jnp.abs(out - ref)))
    assert err < 5e-2, f"mismatch vs pure-JAX reference: max abs err {err}"

    print("KERNEL_OK")
</pallas_src>

<mosaic_0001>
module attributes {stable_mosaic.version = 11 : i64} {
  func.func @_causal_sa_kernel(%arg0: i32, %arg1: memref<8x32xf32, #tpu.memory_space<vmem>>, %arg2: memref<32x96xbf16, #tpu.memory_space<vmem>>, %arg3: memref<4x8x32xbf16, #tpu.memory_space<vmem>>, %arg4: memref<1x32xf32, #tpu.memory_space<vmem>>, %arg5: memref<1x32xf32, #tpu.memory_space<vmem>>, %arg6: memref<1x32xf32, #tpu.memory_space<vmem>>, %arg7: memref<32x64xbf16, #tpu.memory_space<vmem>>, %arg8: memref<1x64xf32, #tpu.memory_space<vmem>>, %arg9: memref<64x32xbf16, #tpu.memory_space<vmem>>, %arg10: memref<1x32xf32, #tpu.memory_space<vmem>>, %arg11: memref<1x32xf32, #tpu.memory_space<vmem>>, %arg12: memref<1x32xf32, #tpu.memory_space<vmem>>, %arg13: memref<8x32xf32, #tpu.memory_space<vmem>>) attributes {dimension_semantics = [#tpu.dimension_semantics<parallel>], iteration_bounds = array<i64: 2>, scalar_prefetch = 0 : i64, scratch_operands = 0 : i64, tpu.core_type = #tpu.core_type<tc>, window_params = [{transform_indices = @transform_0, window_bounds = array<i64: 8, 32>}, {pipeline_mode = #tpu.pipeline_mode<synchronous>, transform_indices = @transform_1, window_bounds = array<i64: 32, 96>}, {pipeline_mode = #tpu.pipeline_mode<synchronous>, transform_indices = @transform_2, window_bounds = array<i64: 4, 8, 32>}, {pipeline_mode = #tpu.pipeline_mode<synchronous>, transform_indices = @transform_3, window_bounds = array<i64: 1, 32>}, {pipeline_mode = #tpu.pipeline_mode<synchronous>, transform_indices = @transform_4, window_bounds = array<i64: 1, 32>}, {pipeline_mode = #tpu.pipeline_mode<synchronous>, transform_indices = @transform_5, window_bounds = array<i64: 1, 32>}, {pipeline_mode = #tpu.pipeline_mode<synchronous>, transform_indices = @transform_6, window_bounds = array<i64: 32, 64>}, {pipeline_mode = #tpu.pipeline_mode<synchronous>, transform_indices = @transform_7, window_bounds = array<i64: 1, 64>}, {pipeline_mode = #tpu.pipeline_mode<synchronous>, transform_indices = @transform_8, window_bounds = array<i64: 64, 32>}, {pipeline_mode = #tpu.pipeline_mode<synchronous>, transform_indices = @transform_9, window_bounds = array<i64: 1, 32>}, {pipeline_mode = #tpu.pipeline_mode<synchronous>, transform_indices = @transform_10, window_bounds = array<i64: 1, 32>}, {pipeline_mode = #tpu.pipeline_mode<synchronous>, transform_indices = @transform_11, window_bounds = array<i64: 1, 32>}, {transform_indices = @transform_12, window_bounds = array<i64: 8, 32>}]} {
    %c0 = arith.constant 0 : index
    %c0_0 = arith.constant 0 : index
    %0 = vector.load %arg1[%c0, %c0_0] : memref<8x32xf32, #tpu.memory_space<vmem>>, vector<8x32xf32>
    %1 = arith.truncf %0 : vector<8x32xf32> to vector<8x32xbf16>
    %c0_1 = arith.constant 0 : index
    %c0_2 = arith.constant 0 : index
    %2 = vector.load %arg2[%c0_1, %c0_2] : memref<32x96xbf16, #tpu.memory_space<vmem>>, vector<32x96xbf16>
    %cst = arith.constant dense<0.000000e+00> : vector<8x96xf32>
    %3 = tpu.matmul %1, %2, %cst {dimension_numbers = #tpu.dot_dimension_numbers<[1], [0], [0], [1], [0, 0, 1, 1], [], []>} : vector<8x32xbf16>, vector<32x96xbf16>, vector<8x96xf32> -> vector<8x96xf32>
    %4 = vector.extract_strided_slice %3 {offsets = [0, 0], sizes = [8, 32], strides = [1, 1]} : vector<8x96xf32> to vector<8x32xf32>
    %cst_3 = arith.constant 0.353553385 : f32
    %5 = vector.broadcast %cst_3 : f32 to vector<8x32xf32>
    %6 = arith.mulf %4, %5 : vector<8x32xf32>
    %7 = arith.truncf %6 : vector<8x32xf32> to vector<8x32xbf16>
    %8 = vector.extract_strided_slice %3 {offsets = [0, 32], sizes = [8, 32], strides = [1, 1]} : vector<8x96xf32> to vector<8x32xf32>
    %9 = arith.truncf %8 : vector<8x32xf32> to vector<8x32xbf16>
    %10 = vector.extract_strided_slice %3 {offsets = [0, 64], sizes = [8, 32], strides = [1, 1]} : vector<8x96xf32> to vector<8x32xf32>
    %11 = arith.truncf %10 : vector<8x32xf32> to vector<8x32xbf16>
    %12 = tpu.iota {dimensions = array<i32: 0>} : vector<8x8xi32>
    %13 = tpu.iota {dimensions = array<i32: 1>} : vector<8x8xi32>
    %14 = arith.cmpi sgt, %13, %12 : vector<8x8xi32>
    %cst_4 = arith.constant -1.000000e+30 : f32
    %cst_5 = arith.constant 0.000000e+00 : f32
    %15 = vector.broadcast %cst_4 : f32 to vector<8x8xf32>
    %16 = vector.broadcast %cst_5 : f32 to vector<8x8xf32>
    %17 = arith.select %14, %15, %16 : vector<8x8xi1>, vector<8x8xf32>
    %c0_6 = arith.constant 0 : index
    %c0_7 = arith.constant 0 : index
    %c0_8 = arith.constant 0 : index
    %18 = vector.load %arg3[%c0_6, %c0_7, %c0_8] : memref<4x8x32xbf16, #tpu.memory_space<vmem>>, vector<4x8x32xbf16>
    %19 = vector.extract_strided_slice %7 {offsets = [0, 0], sizes = [8, 8], strides = [1, 1]} : vector<8x32xbf16> to vector<8x8xbf16>
    %20 = vector.extract_strided_slice %7 {offsets = [0, 8], sizes = [8, 8], strides = [1, 1]} : vector<8x32xbf16> to vector<8x8xbf16>
    %21 = vector.extract_strided_slice %7 {offsets = [0, 16], sizes = [8, 8], strides = [1, 1]} : vector<8x32xbf16> to vector<8x8xbf16>
    %22 = vector.extract_strided_slice %7 {offsets = [0, 24], sizes = [8, 8], strides = [1, 1]} : vector<8x32xbf16> to vector<8x8xbf16>
    %23 = vector.shape_cast %19 : vector<8x8xbf16> to vector<1x8x8xbf16>
    %24 = vector.shape_cast %20 : vector<8x8xbf16> to vector<1x8x8xbf16>
    %25 = vector.shape_cast %21 : vector<8x8xbf16> to vector<1x8x8xbf16>
    %26 = vector.shape_cast %22 : vector<8x8xbf16> to vector<1x8x8xbf16>
    %27 = tpu.concatenate %23, %24, %25, %26 in 0 : vector<1x8x8xbf16>, vector<1x8x8xbf16>, vector<1x8x8xbf16>, vector<1x8x8xbf16> -> vector<4x8x8xbf16>
    %28 = vector.extract_strided_slice %9 {offsets = [0, 0], sizes = [8, 8], strides = [1, 1]} : vector<8x32xbf16> to vector<8x8xbf16>
    %29 = vector.extract_strided_slice %9 {offsets = [0, 8], sizes = [8, 8], strides = [1, 1]} : vector<8x32xbf16> to vector<8x8xbf16>
    %30 = vector.extract_strided_slice %9 {offsets = [0, 16], sizes = [8, 8], strides = [1, 1]} : vector<8x32xbf16> to vector<8x8xbf16>
    %31 = vector.extract_strided_slice %9 {offsets = [0, 24], sizes = [8, 8], strides = [1, 1]} : vector<8x32xbf16> to vector<8x8xbf16>
    %32 = vector.shape_cast %28 : vector<8x8xbf16> to vector<1x8x8xbf16>
    %33 = vector.shape_cast %29 : vector<8x8xbf16> to vector<1x8x8xbf16>
    %34 = vector.shape_cast %30 : vector<8x8xbf16> to vector<1x8x8xbf16>
    %35 = vector.shape_cast %31 : vector<8x8xbf16> to vector<1x8x8xbf16>
    %36 = tpu.concatenate %32, %33, %34, %35 in 0 : vector<1x8x8xbf16>, vector<1x8x8xbf16>, vector<1x8x8xbf16>, vector<1x8x8xbf16> -> vector<4x8x8xbf16>
    %37 = vector.extract_strided_slice %11 {offsets = [0, 0], sizes = [8, 8], strides = [1, 1]} : vector<8x32xbf16> to vector<8x8xbf16>
    %38 = vector.extract_strided_slice %11 {offsets = [0, 8], sizes = [8, 8], strides = [1, 1]} : vector<8x32xbf16> to vector<8x8xbf16>
    %39 = vector.extract_strided_slice %11 {offsets = [0, 16], sizes = [8, 8], strides = [1, 1]} : vector<8x32xbf16> to vector<8x8xbf16>
    %40 = vector.extract_strided_slice %11 {offsets = [0, 24], sizes = [8, 8], strides = [1, 1]} : vector<8x32xbf16> to vector<8x8xbf16>
    %41 = vector.shape_cast %37 : vector<8x8xbf16> to vector<1x8x8xbf16>
    %42 = vector.shape_cast %38 : vector<8x8xbf16> to vector<1x8x8xbf16>
    %43 = vector.shape_cast %39 : vector<8x8xbf16> to vector<1x8x8xbf16>
    %44 = vector.shape_cast %40 : vector<8x8xbf16> to vector<1x8x8xbf16>
    %45 = tpu.concatenate %41, %42, %43, %44 in 0 : vector<1x8x8xbf16>, vector<1x8x8xbf16>, vector<1x8x8xbf16>, vector<1x8x8xbf16> -> vector<4x8x8xbf16>
    "tpu.trace_start"() <{level = 10 : i32, message = "hqd,hkd->hqk"}> : () -> ()
    %cst_9 = arith.constant dense<0.000000e+00> : vector<4x8x8xf32>
    %46 = tpu.matmul %27, %36, %cst_9 {dimension_numbers = #tpu.dot_dimension_numbers<[2], [2], [1], [1], [0, 0, 0, 1, 1, 1], [0], [0]>} : vector<4x8x8xbf16>, vector<4x8x8xbf16>, vector<4x8x8xf32> -> vector<4x8x8xf32>
    "tpu.trace_stop"() : () -> ()
    %47 = vector.shape_cast %17 : vector<8x8xf32> to vector<1x8x8xf32>
    %48 = vector.broadcast %47 : vector<1x8x8xf32> to vector<4x8x8xf32>
    %49 = arith.addf %46, %48 : vector<4x8x8xf32>
    %cst_10 = arith.constant dense<0xFF800000> : vector<4x8xf32>
    %50 = vector.multi_reduction <maximumf>, %49, %cst_10 [2] : vector<4x8x8xf32> to vector<4x8xf32>
    %51 = vector.shape_cast %50 : vector<4x8xf32> to vector<4x8x1xf32>
    %52 = vector.broadcast %51 : vector<4x8x1xf32> to vector<4x8x8xf32>
    %53 = arith.subf %49, %52 : vector<4x8x8xf32>
    %54 = math.exp %53 : vector<4x8x8xf32>
    %cst_11 = arith.constant dense<0.000000e+00> : vector<4x8xf32>
    %55 = vector.multi_reduction <add>, %54, %cst_11 [2] : vector<4x8x8xf32> to vector<4x8xf32>
    %56 = vector.shape_cast %55 : vector<4x8xf32> to vector<4x8x1xf32>
    %57 = tpu.reciprocal %56 {approx = true} : vector<4x8x1xf32> -> vector<4x8x1xf32>
    %58 = vector.broadcast %57 : vector<4x8x1xf32> to vector<4x8x8xf32>
    %59 = arith.mulf %54, %58 : vector<4x8x8xf32>
    %60 = arith.truncf %59 : vector<4x8x8xf32> to vector<4x8x8xbf16>
    "tpu.trace_start"() <{level = 10 : i32, message = "hqk,hkd->hqd"}> : () -> ()
    %cst_12 = arith.constant dense<0.000000e+00> : vector<4x8x8xf32>
    %61 = tpu.matmul %60, %45, %cst_12 {dimension_numbers = #tpu.dot_dimension_numbers<[2], [1], [1], [2], [0, 0, 0, 1, 1, 2], [0], [0]>} : vector<4x8x8xbf16>, vector<4x8x8xbf16>, vector<4x8x8xf32> -> vector<4x8x8xf32>
    "tpu.trace_stop"() : () -> ()
    %62 = arith.truncf %61 : vector<4x8x8xf32> to vector<4x8x8xbf16>
    %cst_13 = arith.constant 0.000000e+00 : f32
    %63 = vector.broadcast %cst_13 : f32 to vector<8x32xf32>
    %64 = vector.extract_strided_slice %62 {offsets = [0, 0, 0], sizes = [1, 8, 8], strides = [1, 1, 1]} : vector<4x8x8xbf16> to vector<1x8x8xbf16>
    %65 = vector.shape_cast %64 : vector<1x8x8xbf16> to vector<8x8xbf16>
    %66 = vector.extract_strided_slice %18 {offsets = [0, 0, 0], sizes = [1, 8, 32], strides = [1, 1, 1]} : vector<4x8x32xbf16> to vector<1x8x32xbf16>
    %67 = vector.shape_cast %66 : vector<1x8x32xbf16> to vector<8x32xbf16>
    %cst_14 = arith.constant dense<0.000000e+00> : vector<8x32xf32>
    %68 = tpu.matmul %65, %67, %cst_14 {dimension_numbers = #tpu.dot_dimension_numbers<[1], [0], [0], [1], [0, 0, 1, 1], [], []>} : vector<8x8xbf16>, vector<8x32xbf16>, vector<8x32xf32> -> vector<8x32xf32>
    %69 = arith.addf %63, %68 : vector<8x32xf32>
    %70 = vector.extract_strided_slice %62 {offsets = [1, 0, 0], sizes = [1, 8, 8], strides = [1, 1, 1]} : vector<4x8x8xbf16> to vector<1x8x8xbf16>
    %71 = vector.shape_cast %70 : vector<1x8x8xbf16> to vector<8x8xbf16>
    %72 = vector.extract_strided_slice %18 {offsets = [1, 0, 0], sizes = [1, 8, 32], strides = [1, 1, 1]} : vector<4x8x32xbf16> to vector<1x8x32xbf16>
    %73 = vector.shape_cast %72 : vector<1x8x32xbf16> to vector<8x32xbf16>
    %cst_15 = arith.constant dense<0.000000e+00> : vector<8x32xf32>
    %74 = tpu.matmul %71, %73, %cst_15 {dimension_numbers = #tpu.dot_dimension_numbers<[1], [0], [0], [1], [0, 0, 1, 1], [], []>} : vector<8x8xbf16>, vector<8x32xbf16>, vector<8x32xf32> -> vector<8x32xf32>
    %75 = arith.addf %69, %74 : vector<8x32xf32>
    %76 = vector.extract_strided_slice %62 {offsets = [2, 0, 0], sizes = [1, 8, 8], strides = [1, 1, 1]} : vector<4x8x8xbf16> to vector<1x8x8xbf16>
    %77 = vector.shape_cast %76 : vector<1x8x8xbf16> to vector<8x8xbf16>
    %78 = vector.extract_strided_slice %18 {offsets = [2, 0, 0], sizes = [1, 8, 32], strides = [1, 1, 1]} : vector<4x8x32xbf16> to vector<1x8x32xbf16>
    %79 = vector.shape_cast %78 : vector<1x8x32xbf16> to vector<8x32xbf16>
    %cst_16 = arith.constant dense<0.000000e+00> : vector<8x32xf32>
    %80 = tpu.matmul %77, %79, %cst_16 {dimension_numbers = #tpu.dot_dimension_numbers<[1], [0], [0], [1], [0, 0, 1, 1], [], []>} : vector<8x8xbf16>, vector<8x32xbf16>, vector<8x32xf32> -> vector<8x32xf32>
    %81 = arith.addf %75, %80 : vector<8x32xf32>
    %82 = vector.extract_strided_slice %62 {offsets = [3, 0, 0], sizes = [1, 8, 8], strides = [1, 1, 1]} : vector<4x8x8xbf16> to vector<1x8x8xbf16>
    %83 = vector.shape_cast %82 : vector<1x8x8xbf16> to vector<8x8xbf16>
    %84 = vector.extract_strided_slice %18 {offsets = [3, 0, 0], sizes = [1, 8, 32], strides = [1, 1, 1]} : vector<4x8x32xbf16> to vector<1x8x32xbf16>
    %85 = vector.shape_cast %84 : vector<1x8x32xbf16> to vector<8x32xbf16>
    %cst_17 = arith.constant dense<0.000000e+00> : vector<8x32xf32>
    %86 = tpu.matmul %83, %85, %cst_17 {dimension_numbers = #tpu.dot_dimension_numbers<[1], [0], [0], [1], [0, 0, 1, 1], [], []>} : vector<8x8xbf16>, vector<8x32xbf16>, vector<8x32xf32> -> vector<8x32xf32>
    %87 = arith.addf %81, %86 : vector<8x32xf32>
    %c0_18 = arith.constant 0 : index
    %c0_19 = arith.constant 0 : index
    %88 = vector.load %arg4[%c0_18, %c0_19] : memref<1x32xf32, #tpu.memory_space<vmem>>, vector<1x32xf32>
    %89 = vector.broadcast %88 : vector<1x32xf32> to vector<8x32xf32>
    %90 = arith.addf %87, %89 : vector<8x32xf32>
    %91 = arith.addf %0, %90 : vector<8x32xf32>
    %cst_20 = arith.constant dense<0.000000e+00> : vector<8xf32>
    %92 = vector.multi_reduction <add>, %91, %cst_20 [1] : vector<8x32xf32> to vector<8xf32>
    %93 = vector.shape_cast %92 : vector<8xf32> to vector<8x1xf32>
    %cst_21 = arith.constant 3.200000e+01 : f32
    %94 = vector.broadcast %cst_21 : f32 to vector<8x1xf32>
    %95 = arith.divf %93, %94 : vector<8x1xf32>
    %96 = vector.broadcast %95 : vector<8x1xf32> to vector<8x32xf32>
    %97 = arith.subf %91, %96 : vector<8x32xf32>
    %98 = arith.mulf %97, %97 : vector<8x32xf32>
    %cst_22 = arith.constant dense<0.000000e+00> : vector<8xf32>
    %99 = vector.multi_reduction <add>, %98, %cst_22 [1] : vector<8x32xf32> to vector<8xf32>
    %100 = vector.shape_cast %99 : vector<8xf32> to vector<8x1xf32>
    %cst_23 = arith.constant 3.200000e+01 : f32
    %101 = vector.broadcast %cst_23 : f32 to vector<8x1xf32>
    %102 = arith.divf %100, %101 : vector<8x1xf32>
    %103 = vector.broadcast %95 : vector<8x1xf32> to vector<8x32xf32>
    %104 = arith.subf %91, %103 : vector<8x32xf32>
    %cst_24 = arith.constant 9.99999974E-6 : f32
    %105 = vector.broadcast %cst_24 : f32 to vector<8x1xf32>
    %106 = arith.addf %102, %105 : vector<8x1xf32>
    %107 = math.rsqrt %106 : vector<8x1xf32>
    %108 = vector.broadcast %107 : vector<8x1xf32> to vector<8x32xf32>
    %109 = arith.mulf %104, %108 : vector<8x32xf32>
    %c0_25 = arith.constant 0 : index
    %c0_26 = arith.constant 0 : index
    %110 = vector.load %arg5[%c0_25, %c0_26] : memref<1x32xf32, #tpu.memory_space<vmem>>, vector<1x32xf32>
    %111 = vector.broadcast %110 : vector<1x32xf32> to vector<8x32xf32>
    %112 = arith.mulf %109, %111 : vector<8x32xf32>
    %c0_27 = arith.constant 0 : index
    %c0_28 = arith.constant 0 : index
    %113 = vector.load %arg6[%c0_27, %c0_28] : memref<1x32xf32, #tpu.memory_space<vmem>>, vector<1x32xf32>
    %114 = vector.broadcast %113 : vector<1x32xf32> to vector<8x32xf32>
    %115 = arith.addf %112, %114 : vector<8x32xf32>
    %116 = arith.truncf %115 : vector<8x32xf32> to vector<8x32xbf16>
    %c0_29 = arith.constant 0 : index
    %c0_30 = arith.constant 0 : index
    %117 = vector.load %arg7[%c0_29, %c0_30] : memref<32x64xbf16, #tpu.memory_space<vmem>>, vector<32x64xbf16>
    %cst_31 = arith.constant dense<0.000000e+00> : vector<8x64xf32>
    %118 = tpu.matmul %116, %117, %cst_31 {dimension_numbers = #tpu.dot_dimension_numbers<[1], [0], [0], [1], [0, 0, 1, 1], [], []>} : vector<8x32xbf16>, vector<32x64xbf16>, vector<8x64xf32> -> vector<8x64xf32>
    %c0_32 = arith.constant 0 : index
    %c0_33 = arith.constant 0 : index
    %119 = vector.load %arg8[%c0_32, %c0_33] : memref<1x64xf32, #tpu.memory_space<vmem>>, vector<1x64xf32>
    %120 = vector.broadcast %119 : vector<1x64xf32> to vector<8x64xf32>
    %121 = arith.addf %118, %120 : vector<8x64xf32>
    %cst_34 = arith.constant 5.000000e-01 : f32
    %122 = vector.broadcast %cst_34 : f32 to vector<8x64xf32>
    %123 = arith.mulf %122, %121 : vector<8x64xf32>
    %cst_35 = arith.constant 4.471500e-02 : f32
    %124 = vector.broadcast %cst_35 : f32 to vector<8x64xf32>
    %125 = arith.mulf %124, %121 : vector<8x64xf32>
    %126 = arith.mulf %125, %121 : vector<8x64xf32>
    %127 = arith.mulf %126, %121 : vector<8x64xf32>
    %128 = arith.addf %121, %127 : vector<8x64xf32>
    %cst_36 = arith.constant 0.797884583 : f32
    %129 = vector.broadcast %cst_36 : f32 to vector<8x64xf32>
    %130 = arith.mulf %129, %128 : vector<8x64xf32>
    %131 = math.tanh %130 : vector<8x64xf32>
    %cst_37 = arith.constant 1.000000e+00 : f32
    %132 = vector.broadcast %cst_37 : f32 to vector<8x64xf32>
    %133 = arith.addf %132, %131 : vector<8x64xf32>
    %134 = arith.mulf %123, %133 : vector<8x64xf32>
    %135 = arith.truncf %134 : vector<8x64xf32> to vector<8x64xbf16>
    %c0_38 = arith.constant 0 : index
    %c0_39 = arith.constant 0 : index
    %136 = vector.load %arg9[%c0_38, %c0_39] : memref<64x32xbf16, #tpu.memory_space<vmem>>, vector<64x32xbf16>
    %cst_40 = arith.constant dense<0.000000e+00> : vector<8x32xf32>
    %137 = tpu.matmul %135, %136, %cst_40 {dimension_numbers = #tpu.dot_dimension_numbers<[1], [0], [0], [1], [0, 0, 1, 1], [], []>} : vector<8x64xbf16>, vector<64x32xbf16>, vector<8x32xf32> -> vector<8x32xf32>
    %c0_41 = arith.constant 0 : index
    %c0_42 = arith.constant 0 : index
    %138 = vector.load %arg10[%c0_41, %c0_42] : memref<1x32xf32, #tpu.memory_space<vmem>>, vector<1x32xf32>
    %139 = vector.broadcast %138 : vector<1x32xf32> to vector<8x32xf32>
    %140 = arith.addf %137, %139 : vector<8x32xf32>
    %141 = arith.addf %115, %140 : vector<8x32xf32>
    %cst_43 = arith.constant dense<0.000000e+00> : vector<8xf32>
    %142 = vector.multi_reduction <add>, %141, %cst_43 [1] : vector<8x32xf32> to vector<8xf32>
    %143 = vector.shape_cast %142 : vector<8xf32> to vector<8x1xf32>
    %cst_44 = arith.constant 3.200000e+01 : f32
    %144 = vector.broadcast %cst_44 : f32 to vector<8x1xf32>
    %145 = arith.divf %143, %144 : vector<8x1xf32>
    %146 = vector.broadcast %145 : vector<8x1xf32> to vector<8x32xf32>
    %147 = arith.subf %141, %146 : vector<8x32xf32>
    %148 = arith.mulf %147, %147 : vector<8x32xf32>
    %cst_45 = arith.constant dense<0.000000e+00> : vector<8xf32>
    %149 = vector.multi_reduction <add>, %148, %cst_45 [1] : vector<8x32xf32> to vector<8xf32>
    %150 = vector.shape_cast %149 : vector<8xf32> to vector<8x1xf32>
    %cst_46 = arith.constant 3.200000e+01 : f32
    %151 = vector.broadcast %cst_46 : f32 to vector<8x1xf32>
    %152 = arith.divf %150, %151 : vector<8x1xf32>
    %153 = vector.broadcast %145 : vector<8x1xf32> to vector<8x32xf32>
    %154 = arith.subf %141, %153 : vector<8x32xf32>
    %cst_47 = arith.constant 9.99999974E-6 : f32
    %155 = vector.broadcast %cst_47 : f32 to vector<8x1xf32>
    %156 = arith.addf %152, %155 : vector<8x1xf32>
    %157 = math.rsqrt %156 : vector<8x1xf32>
    %158 = vector.broadcast %157 : vector<8x1xf32> to vector<8x32xf32>
    %159 = arith.mulf %154, %158 : vector<8x32xf32>
    %c0_48 = arith.constant 0 : index
    %c0_49 = arith.constant 0 : index
    %160 = vector.load %arg11[%c0_48, %c0_49] : memref<1x32xf32, #tpu.memory_space<vmem>>, vector<1x32xf32>
    %161 = vector.broadcast %160 : vector<1x32xf32> to vector<8x32xf32>
    %162 = arith.mulf %159, %161 : vector<8x32xf32>
    %c0_50 = arith.constant 0 : index
    %c0_51 = arith.constant 0 : index
    %163 = vector.load %arg12[%c0_50, %c0_51] : memref<1x32xf32, #tpu.memory_space<vmem>>, vector<1x32xf32>
    %164 = vector.broadcast %163 : vector<1x32xf32> to vector<8x32xf32>
    %165 = arith.addf %162, %164 : vector<8x32xf32>
    %c0_52 = arith.constant 0 : index
    %c0_53 = arith.constant 0 : index
    %166 = vector.load %arg13[%c0_52, %c0_53] : memref<8x32xf32, #tpu.memory_space<vmem>>, vector<8x32xf32>
    tpu.vector_store %arg13[%c0_52, %c0_53], %165 {strides = array<i32>} : memref<8x32xf32, #tpu.memory_space<vmem>>, vector<8x32xf32>,
    return
  }
  func.func @transform_0(%arg0: i32) -> (i32, i32) {
    %c0_i32 = arith.constant 0 : i32
    %c0_i32_0 = arith.constant 0 : i32
    return %arg0, %c0_i32 : i32, i32
  }
  func.func @transform_1(%arg0: i32) -> (i32, i32) {
    %c0_i32 = arith.constant 0 : i32
    %c0_i32_0 = arith.constant 0 : i32
    %c0_i32_1 = arith.constant 0 : i32
    return %c0_i32, %c0_i32_0 : i32, i32
  }
  func.func @transform_2(%arg0: i32) -> (i32, i32, i32) {
    %c0_i32 = arith.constant 0 : i32
    %c0_i32_0 = arith.constant 0 : i32
    %c0_i32_1 = arith.constant 0 : i32
    %c0_i32_2 = arith.constant 0 : i32
    return %c0_i32, %c0_i32_0, %c0_i32_1 : i32, i32, i32
  }
  func.func @transform_3(%arg0: i32) -> (i32, i32) {
    %c0_i32 = arith.constant 0 : i32
    %c0_i32_0 = arith.constant 0 : i32
    %c0_i32_1 = arith.constant 0 : i32
    return %c0_i32, %c0_i32_0 : i32, i32
  }
  func.func @transform_4(%arg0: i32) -> (i32, i32) {
    %c0_i32 = arith.constant 0 : i32
    %c0_i32_0 = arith.constant 0 : i32
    %c0_i32_1 = arith.constant 0 : i32
    return %c0_i32, %c0_i32_0 : i32, i32
  }
  func.func @transform_5(%arg0: i32) -> (i32, i32) {
    %c0_i32 = arith.constant 0 : i32
    %c0_i32_0 = arith.constant 0 : i32
    %c0_i32_1 = arith.constant 0 : i32
    return %c0_i32, %c0_i32_0 : i32, i32
  }
  func.func @transform_6(%arg0: i32) -> (i32, i32) {
    %c0_i32 = arith.constant 0 : i32
    %c0_i32_0 = arith.constant 0 : i32
    %c0_i32_1 = arith.constant 0 : i32
    return %c0_i32, %c0_i32_0 : i32, i32
  }
  func.func @transform_7(%arg0: i32) -> (i32, i32) {
    %c0_i32 = arith.constant 0 : i32
    %c0_i32_0 = arith.constant 0 : i32
    %c0_i32_1 = arith.constant 0 : i32
    return %c0_i32, %c0_i32_0 : i32, i32
  }
  func.func @transform_8(%arg0: i32) -> (i32, i32) {
    %c0_i32 = arith.constant 0 : i32
    %c0_i32_0 = arith.constant 0 : i32
    %c0_i32_1 = arith.constant 0 : i32
    return %c0_i32, %c0_i32_0 : i32, i32
  }
  func.func @transform_9(%arg0: i32) -> (i32, i32) {
    %c0_i32 = arith.constant 0 : i32
    %c0_i32_0 = arith.constant 0 : i32
    %c0_i32_1 = arith.constant 0 : i32
    return %c0_i32, %c0_i32_0 : i32, i32
  }
  func.func @transform_10(%arg0: i32) -> (i32, i32) {
    %c0_i32 = arith.constant 0 : i32
    %c0_i32_0 = arith.constant 0 : i32
    %c0_i32_1 = arith.constant 0 : i32
    return %c0_i32, %c0_i32_0 : i32, i32
  }
  func.func @transform_11(%arg0: i32) -> (i32, i32) {
    %c0_i32 = arith.constant 0 : i32
    %c0_i32_0 = arith.constant 0 : i32
    %c0_i32_1 = arith.constant 0 : i32
    return %c0_i32, %c0_i32_0 : i32, i32
  }
  func.func @transform_12(%arg0: i32) -> (i32, i32) {
    %c0_i32 = arith.constant 0 : i32
    %c0_i32_0 = arith.constant 0 : i32
    return %arg0, %c0_i32 : i32, i32
  }
}

</mosaic_0001>

<llo_original>
// kernel: tpu_custom_call.1
$region0: #{tpu_custom_call.1}
  #allocation0 [shape = 'u32[]', space=smem, size = 0x4, offset = 0x4, fixed_abs, tag = 'smem constant byte address 0x4 - core index']
  #allocation1 [shape = 'u32[72,128]{1,0:T(1,128)}', space=vmem, size = 0x9000, scoped, tag = 'internal scratch']
  %s0 = inlined_call_operand.vmem [shape: f32[16,32], index: 0, kind: input, shape index: {}]
  %s1 = inlined_call_operand.vmem [shape: bf16[32,96], index: 1, kind: input, shape index: {}]
  %s2 = inlined_call_operand.vmem [shape: bf16[4,8,32], index: 2, kind: input, shape index: {}]
  %s3 = inlined_call_operand.vmem [shape: f32[1,32], index: 3, kind: input, shape index: {}]
  %s4 = inlined_call_operand.vmem [shape: f32[1,32], index: 4, kind: input, shape index: {}]
  %s5 = inlined_call_operand.vmem [shape: f32[1,32], index: 5, kind: input, shape index: {}]
  %s6 = inlined_call_operand.hbm [shape: bf16[32,64], index: 6, kind: input, shape index: {}]
  %s7 = inlined_call_operand.vmem [shape: f32[1,64], index: 7, kind: input, shape index: {}]
  %s8 = inlined_call_operand.vmem [shape: bf16[64,32], index: 8, kind: input, shape index: {}]
  %s9 = inlined_call_operand.vmem [shape: f32[1,32], index: 9, kind: input, shape index: {}]
  %s10 = inlined_call_operand.vmem [shape: f32[1,32], index: 10, kind: input, shape index: {}]
  %s11 = inlined_call_operand.vmem [shape: f32[1,32], index: 11, kind: input, shape index: {}]
  %s12 = inlined_call_operand.hbm [shape: f32[16,32], index: 12, kind: output, shape index: {}]
  %s13 = sld [smem:[#allocation0]]
  $region85: #{tpu_custom_call.1} parent=0
    _
  %s15 = ssub.s32 1, %s13
  %s16 = scalar_select 0, %s15, %s13
  $region1: #{tpu_custom_call.1} parent=0
    #allocation2 [shape = 'u8[8192]{0}', space=vmem, size = 0x2000, scoped, tag = 'input window, operand 6, single buffered']
    #allocation3 [shape = 's32[2]{0}', space=sflag, size = 0x8, scoped, tag = 'scoped memory for tpu_custom_call.1']
    #allocation4 [shape = 's32[2]{0}', space=sflag, size = 0x8, scoped, tag = 'scoped memory for tpu_custom_call.1']
    #allocation5 [shape = 'u8[8192]{0}', space=vmem, size = 0x2000, scoped, tag = 'output window, operand 0']
    %17 = vsyncpa [#allocation3], 0
    %18 = vsyncpa [#allocation4], 0
    %s19 = scalar_lea.sflag [#allocation4], 1
    %20 = vsyncpa %s19, 0
    loop: start=0, step=1, limit=4
    $region2: #{tpu_custom_call.1} parent=1 // loop_pre_header
      _
    $region3: #{tpu_custom_call.1} parent=1 // loop_header
      %s22 = sphi 0, %s26
      %p23 = scmp.ge.s32.totalorder %s22, 4
      %s32 = sphi 0, %s34
      %s35 = sphi 0, %s32
      %s36 = sphi 0, %s35
      %s52 = sphi 0, %s36
      %s56 = sphi 0, %s56
      %s58 = sphi 0, %s56
      %s59 = sphi 0, %s58
      %s73 = sphi 0, %s59
      %s77 = sphi 0, %s77
      %s79 = sphi 0, %s77
      %s80 = sphi 0, %s79
      %s94 = sphi 0, %s80
      %s98 = sphi 0, %s98
      %s100 = sphi 0, %s98
      %s101 = sphi 0, %s100
      %s115 = sphi 0, %s101
      %s119 = sphi 0, %s119
      %s121 = sphi 0, %s119
      %s122 = sphi 0, %s121
      %s136 = sphi 0, %s122
      %s140 = sphi 0, %s140
      %s142 = sphi 0, %s140
      %s143 = sphi 0, %s142
      %s157 = sphi 0, %s143
      %s161 = sphi 0, %s161
      %s163 = sphi 0, %s161
      %s164 = sphi 0, %s163
      %s178 = sphi 0, %s164
      %s182 = sphi 0, %s182
      %s184 = sphi 0, %s182
      %s185 = sphi 0, %s184
      %s199 = sphi 0, %s185
      %s203 = sphi 0, %s203
      %s205 = sphi 0, %s203
      %s206 = sphi 0, %s205
      %s220 = sphi 0, %s206
      %s224 = sphi 0, %s224
      %s226 = sphi 0, %s224
      %s227 = sphi 0, %s226
      %s241 = sphi 0, %s227
      %s245 = sphi 0, %s245
      %s247 = sphi 0, %s245
      %s248 = sphi 0, %s247
      %s262 = sphi 0, %s248
      %s266 = sphi 0, %s266
      %s268 = sphi 0, %s266
      %s269 = sphi 0, %s268
      %s283 = sphi 0, %s269
      %s289 = sphi 0, %s291
      %s292 = sphi 0, %s289
      %s293 = sphi 0, %s292
      %s309 = sphi 0, %s293
    $region4: #{tpu_custom_call.1} parent=1 // loop_header_branch
      %25 = sbr.rel (%p23) target = $region8
    $region5: #{tpu_custom_call.1} parent=1 // loop_body
      %s27 = ssub.s32 %s22, 1
      %s28 = ssub.s32 %s22, 2
      %s29 = sadd.s32 %s22, 1
      %s30 = ssub.s32 %s22, %s29
      %p31 = scmp.eq.s32.totalorder %s30, 0
      %s33 = sadd.s32 %s32, 1
      %s34 = scalar_select %p31, %s32, %s33
      %p37 = pneg %p31
      %p38 = scmp.eq.s32.totalorder %s22, 1
      %p39 = por %p37, %p38
      %p40 = scmp.ne.s32.totalorder %s32, %s35
      %p41 = scmp.eq.s32.totalorder %s22, 0
      %p42 = por %p40, %p41
      %p43 = scmp.ne.s32.totalorder %s32, %s35
      %p44 = scmp.eq.s32.totalorder %s27, 1
      %p45 = por %p43, %p44
      %p46 = scmp.ne.s32.totalorder %s35, %s36
      %p47 = scmp.eq.s32.totalorder %s27, 0
      %p48 = por %p46, %p47
      %p49 = scmp.ne.s32.totalorder %s35, %s36
      %p50 = scmp.eq.s32.totalorder %s28, 1
      %p51 = por %p49, %p50
      %p53 = scmp.ne.s32.totalorder %s36, %s52
      %p54 = scmp.eq.s32.totalorder %s28, 0
      %p55 = por %p53, %p54
      %s57 = sadd.s32 %s56, 1
      %p60 = scmp.eq.s32.totalorder %s22, 1
      %p61 = scmp.ne.s32.totalorder %s56, %s58
      %p62 = scmp.eq.s32.totalorder %s22, 0
      %p63 = por %p61, %p62
      %p64 = scmp.ne.s32.totalorder %s56, %s58
      %p65 = scmp.eq.s32.totalorder %s27, 1
      %p66 = por %p64, %p65
      %p67 = scmp.ne.s32.totalorder %s58, %s59
      %p68 = scmp.eq.s32.totalorder %s27, 0
      %p69 = por %p67, %p68
      %p70 = scmp.ne.s32.totalorder %s58, %s59
      %p71 = scmp.eq.s32.totalorder %s28, 1
      %p72 = por %p70, %p71
      %p74 = scmp.ne.s32.totalorder %s59, %s73
      %p75 = scmp.eq.s32.totalorder %s28, 0
      %p76 = por %p74, %p75
      %s78 = sadd.s32 %s77, 1
      %p81 = scmp.eq.s32.totalorder %s22, 1
      %p82 = scmp.ne.s32.totalorder %s77, %s79
      %p83 = scmp.eq.s32.totalorder %s22, 0
      %p84 = por %p82, %p83
      %p85 = scmp.ne.s32.totalorder %s77, %s79
      %p86 = scmp.eq.s32.totalorder %s27, 1
      %p87 = por %p85, %p86
      %p88 = scmp.ne.s32.totalorder %s79, %s80
      %p89 = scmp.eq.s32.totalorder %s27, 0
      %p90 = por %p88, %p89
      %p91 = scmp.ne.s32.totalorder %s79, %s80
      %p92 = scmp.eq.s32.totalorder %s28, 1
      %p93 = por %p91, %p92
      %p95 = scmp.ne.s32.totalorder %s80, %s94
      %p96 = scmp.eq.s32.totalorder %s28, 0
      %p97 = por %p95, %p96
      %s99 = sadd.s32 %s98, 1
      %p102 = scmp.eq.s32.totalorder %s22, 1
      %p103 = scmp.ne.s32.totalorder %s98, %s100
      %p104 = scmp.eq.s32.totalorder %s22, 0
      %p105 = por %p103, %p104
      %p106 = scmp.ne.s32.totalorder %s98, %s100
      %p107 = scmp.eq.s32.totalorder %s27, 1
      %p108 = por %p106, %p107
      %p109 = scmp.ne.s32.totalorder %s100, %s101
      %p110 = scmp.eq.s32.totalorder %s27, 0
      %p111 = por %p109, %p110
      %p112 = scmp.ne.s32.totalorder %s100, %s101
      %p113 = scmp.eq.s32.totalorder %s28, 1
      %p114 = por %p112, %p113
      %p116 = scmp.ne.s32.totalorder %s101, %s115
      %p117 = scmp.eq.s32.totalorder %s28, 0
      %p118 = por %p116, %p117
      %s120 = sadd.s32 %s119, 1
      %p123 = scmp.eq.s32.totalorder %s22, 1
      %p124 = scmp.ne.s32.totalorder %s119, %s121
      %p125 = scmp.eq.s32.totalorder %s22, 0
      %p126 = por %p124, %p125
      %p127 = scmp.ne.s32.totalorder %s119, %s121
      %p128 = scmp.eq.s32.totalorder %s27, 1
      %p129 = por %p127, %p128
      %p130 = scmp.ne.s32.totalorder %s121, %s122
      %p131 = scmp.eq.s32.totalorder %s27, 0
      %p132 = por %p130, %p131
      %p133 = scmp.ne.s32.totalorder %s121, %s122
      %p134 = scmp.eq.s32.totalorder %s28, 1
      %p135 = por %p133, %p134
      %p137 = scmp.ne.s32.totalorder %s122, %s136
      %p138 = scmp.eq.s32.totalorder %s28, 0
      %p139 = por %p137, %p138
      %s141 = sadd.s32 %s140, 1
      %p144 = scmp.eq.s32.totalorder %s22, 1
      %p145 = scmp.ne.s32.totalorder %s140, %s142
      %p146 = scmp.eq.s32.totalorder %s22, 0
      %p147 = por %p145, %p146
      %p148 = scmp.ne.s32.totalorder %s140, %s142
      %p149 = scmp.eq.s32.totalorder %s27, 1
      %p150 = por %p148, %p149
      %p151 = scmp.ne.s32.totalorder %s142, %s143
      %p152 = scmp.eq.s32.totalorder %s27, 0
      %p153 = por %p151, %p152
      %p154 = scmp.ne.s32.totalorder %s142, %s143
      %p155 = scmp.eq.s32.totalorder %s28, 1
      %p156 = por %p154, %p155
      %p158 = scmp.ne.s32.totalorder %s143, %s157
      %p159 = scmp.eq.s32.totalorder %s28, 0
      %p160 = por %p158, %p159
      %s162 = sadd.s32 %s161, 1
      %p165 = scmp.eq.s32.totalorder %s22, 1
      %p166 = scmp.ne.s32.totalorder %s161, %s163
      %p167 = scmp.eq.s32.totalorder %s22, 0
      %p168 = por %p166, %p167
      %p169 = scmp.ne.s32.totalorder %s161, %s163
      %p170 = scmp.eq.s32.totalorder %s27, 1
      %p171 = por %p169, %p170
      %p172 = scmp.ne.s32.totalorder %s163, %s164
      %p173 = scmp.eq.s32.totalorder %s27, 0
      %p174 = por %p172, %p173
      %p175 = scmp.ne.s32.totalorder %s163, %s164
      %p176 = scmp.eq.s32.totalorder %s28, 1
      %p177 = por %p175, %p176
      %p179 = scmp.ne.s32.totalorder %s164, %s178
      %p180 = scmp.eq.s32.totalorder %s28, 0
      %p181 = por %p179, %p180
      %s183 = sadd.s32 %s182, 1
      %p186 = scmp.eq.s32.totalorder %s22, 1
      %p187 = scmp.ne.s32.totalorder %s182, %s184
      %p188 = scmp.eq.s32.totalorder %s22, 0
      %p189 = por %p187, %p188
      %p190 = scmp.ne.s32.totalorder %s182, %s184
      %p191 = scmp.eq.s32.totalorder %s27, 1
      %p192 = por %p190, %p191
      %p193 = scmp.ne.s32.totalorder %s184, %s185
      %p194 = scmp.eq.s32.totalorder %s27, 0
      %p195 = por %p193, %p194
      %p196 = scmp.ne.s32.totalorder %s184, %s185
      %p197 = scmp.eq.s32.totalorder %s28, 1
      %p198 = por %p196, %p197
      %p200 = scmp.ne.s32.totalorder %s185, %s199
      %p201 = scmp.eq.s32.totalorder %s28, 0
      %p202 = por %p200, %p201
      %s204 = sadd.s32 %s203, 1
      %p207 = scmp.eq.s32.totalorder %s22, 1
      %p208 = scmp.ne.s32.totalorder %s203, %s205
      %p209 = scmp.eq.s32.totalorder %s22, 0
      %p210 = por %p208, %p209
      %p211 = scmp.ne.s32.totalorder %s203, %s205
      %p212 = scmp.eq.s32.totalorder %s27, 1
      %p213 = por %p211, %p212
      %p214 = scmp.ne.s32.totalorder %s205, %s206
      %p215 = scmp.eq.s32.totalorder %s27, 0
      %p216 = por %p214, %p215
      %p217 = scmp.ne.s32.totalorder %s205, %s206
      %p218 = scmp.eq.s32.totalorder %s28, 1
      %p219 = por %p217, %p218
      %p221 = scmp.ne.s32.totalorder %s206, %s220
      %p222 = scmp.eq.s32.totalorder %s28, 0
      %p223 = por %p221, %p222
      %s225 = sadd.s32 %s224, 1
      %p228 = scmp.eq.s32.totalorder %s22, 1
      %p229 = scmp.ne.s32.totalorder %s224, %s226
      %p230 = scmp.eq.s32.totalorder %s22, 0
      %p231 = por %p229, %p230
      %p232 = scmp.ne.s32.totalorder %s224, %s226
      %p233 = scmp.eq.s32.totalorder %s27, 1
      %p234 = por %p232, %p233
      %p235 = scmp.ne.s32.totalorder %s226, %s227
      %p236 = scmp.eq.s32.totalorder %s27, 0
      %p237 = por %p235, %p236
      %p238 = scmp.ne.s32.totalorder %s226, %s227
      %p239 = scmp.eq.s32.totalorder %s28, 1
      %p240 = por %p238, %p239
      %p242 = scmp.ne.s32.totalorder %s227, %s241
      %p243 = scmp.eq.s32.totalorder %s28, 0
      %p244 = por %p242, %p243
      %s246 = sadd.s32 %s245, 1
      %p249 = scmp.eq.s32.totalorder %s22, 1
      %p250 = scmp.ne.s32.totalorder %s245, %s247
      %p251 = scmp.eq.s32.totalorder %s22, 0
      %p252 = por %p250, %p251
      %p253 = scmp.ne.s32.totalorder %s245, %s247
      %p254 = scmp.eq.s32.totalorder %s27, 1
      %p255 = por %p253, %p254
      %p256 = scmp.ne.s32.totalorder %s247, %s248
      %p257 = scmp.eq.s32.totalorder %s27, 0
      %p258 = por %p256, %p257
      %p259 = scmp.ne.s32.totalorder %s247, %s248
      %p260 = scmp.eq.s32.totalorder %s28, 1
      %p261 = por %p259, %p260
      %p263 = scmp.ne.s32.totalorder %s248, %s262
      %p264 = scmp.eq.s32.totalorder %s28, 0
      %p265 = por %p263, %p264
      %s267 = sadd.s32 %s266, 1
      %p270 = scmp.eq.s32.totalorder %s22, 1
      %p271 = scmp.ne.s32.totalorder %s266, %s268
      %p272 = scmp.eq.s32.totalorder %s22, 0
      %p273 = por %p271, %p272
      %p274 = scmp.ne.s32.totalorder %s266, %s268
      %p275 = scmp.eq.s32.totalorder %s27, 1
      %p276 = por %p274, %p275
      %p277 = scmp.ne.s32.totalorder %s268, %s269
      %p278 = scmp.eq.s32.totalorder %s27, 0
      %p279 = por %p277, %p278
      %p280 = scmp.ne.s32.totalorder %s268, %s269
      %p281 = scmp.eq.s32.totalorder %s28, 1
      %p282 = por %p280, %p281
      %p284 = scmp.ne.s32.totalorder %s269, %s283
      %p285 = scmp.eq.s32.totalorder %s28, 0
      %p286 = por %p284, %p285
      %s287 = ssub.s32 %s22, %s29
      %p288 = scmp.eq.s32.totalorder %s287, 0
      %s290 = sadd.s32 %s289, 1
      %s291 = scalar_select %p288, %s289, %s290
      %p294 = pneg %p288
      %p295 = scmp.eq.s32.totalorder %s22, 1
      %p296 = por %p294, %p295
      %p297 = scmp.ne.s32.totalorder %s289, %s292
      %p298 = scmp.eq.s32.totalorder %s22, 0
      %p299 = por %p297, %p298
      %p300 = scmp.ne.s32.totalorder %s289, %s292
      %p301 = scmp.eq.s32.totalorder %s27, 1
      %p302 = por %p300, %p301
      %p303 = scmp.ne.s32.totalorder %s292, %s293
      %p304 = scmp.eq.s32.totalorder %s27, 0
      %p305 = por %p303, %p304
      %p306 = scmp.ne.s32.totalorder %s292, %s293
      %p307 = scmp.eq.s32.totalorder %s28, 1
      %p308 = por %p306, %p307
      %p310 = scmp.ne.s32.totalorder %s293, %s309
      %p311 = scmp.eq.s32.totalorder %s28, 0
      %p312 = por %p310, %p311
      %p313 = scmp.le.s32.totalorder 1, %s22
      %p314 = scmp.lt.s32.totalorder %s22, 3
      %p315 = pnand %p313, %p314
      %p316 = pneg %p315
      // Predicated region
      $region9: #{tpu_custom_call.1} parent=5 // pred_check
        _
      $region10: #{tpu_custom_call.1} parent=5 // pred_check_branch
        %318 = sbr.rel (%p315) target = $region12
      $region11: #{tpu_custom_call.1} parent=5 // pred_region
        %s319 = ssub.s32 %s22, 1
        // Predicated region
        $region13: #{tpu_custom_call.1} parent=11 // pred_check
          %p320 = pneg %p69
        $region14: #{tpu_custom_call.1} parent=11 // pred_check_branch
          %322 = sbr.rel (%p320) target = $region16
        $region15: #{tpu_custom_call.1} parent=11 // pred_region
          _
        $region16: #{tpu_custom_call.1} parent=11 // pred_fallthru
          _
        // Predicated region
        $region17: #{tpu_custom_call.1} parent=11 // pred_check
          %p323 = pneg %p90
        $region18: #{tpu_custom_call.1} parent=11 // pred_check_branch
          %325 = sbr.rel (%p323) target = $region20
        $region19: #{tpu_custom_call.1} parent=11 // pred_region
          _
        $region20: #{tpu_custom_call.1} parent=11 // pred_fallthru
          _
        // Predicated region
        $region21: #{tpu_custom_call.1} parent=11 // pred_check
          %p326 = pneg %p111
        $region22: #{tpu_custom_call.1} parent=11 // pred_check_branch
          %328 = sbr.rel (%p326) target = $region24
        $region23: #{tpu_custom_call.1} parent=11 // pred_region
          _
        $region24: #{tpu_custom_call.1} parent=11 // pred_fallthru
          _
        // Predicated region
        $region25: #{tpu_custom_call.1} parent=11 // pred_check
          %p329 = pneg %p132
        $region26: #{tpu_custom_call.1} parent=11 // pred_check_branch
          %331 = sbr.rel (%p329) target = $region28
        $region27: #{tpu_custom_call.1} parent=11 // pred_region
          _
        $region28: #{tpu_custom_call.1} parent=11 // pred_fallthru
          _
        // Predicated region
        $region29: #{tpu_custom_call.1} parent=11 // pred_check
          %p332 = pneg %p153
        $region30: #{tpu_custom_call.1} parent=11 // pred_check_branch
          %334 = sbr.rel (%p332) target = $region32
        $region31: #{tpu_custom_call.1} parent=11 // pred_region
          _
        $region32: #{tpu_custom_call.1} parent=11 // pred_fallthru
          _
        // Predicated region
        $region33: #{tpu_custom_call.1} parent=11 // pred_check
          %p335 = pneg %p174
        $region34: #{tpu_custom_call.1} parent=11 // pred_check_branch
          %337 = sbr.rel (%p335) target = $region36
        $region35: #{tpu_custom_call.1} parent=11 // pred_region
          %339 = vsyncadd [#allocation3], 0
          %s340 = sshll.u32 %s6, 4
          %s341 = int_to_ptr.hbm [resolvable:$true] %s340
          %s342 = sshll.u32 [#allocation2], 4
          %s343 = int_to_ptr.vmem [resolvable:$true] %s342
          %348 = dma.hbm_to_vmem [thread:$0]  %s341, 256, %s343, [#allocation3], 64, 64, 4
        $region36: #{tpu_custom_call.1} parent=11 // pred_fallthru
          _
        // Predicated region
        $region37: #{tpu_custom_call.1} parent=11 // pred_check
          %p349 = pneg %p195
        $region38: #{tpu_custom_call.1} parent=11 // pred_check_branch
          %351 = sbr.rel (%p349) target = $region40
        $region39: #{tpu_custom_call.1} parent=11 // pred_region
          _
        $region40: #{tpu_custom_call.1} parent=11 // pred_fallthru
          _
        // Predicated region
        $region41: #{tpu_custom_call.1} parent=11 // pred_check
          %p352 = pneg %p216
        $region42: #{tpu_custom_call.1} parent=11 // pred_check_branch
          %354 = sbr.rel (%p352) target = $region44
        $region43: #{tpu_custom_call.1} parent=11 // pred_region
          _
        $region44: #{tpu_custom_call.1} parent=11 // pred_fallthru
          _
        // Predicated region
        $region45: #{tpu_custom_call.1} parent=11 // pred_check
          %p355 = pneg %p237
        $region46: #{tpu_custom_call.1} parent=11 // pred_check_branch
          %357 = sbr.rel (%p355) target = $region48
        $region47: #{tpu_custom_call.1} parent=11 // pred_region
          _
        $region48: #{tpu_custom_call.1} parent=11 // pred_fallthru
          _
        // Predicated region
        $region49: #{tpu_custom_call.1} parent=11 // pred_check
          %p358 = pneg %p258
        $region50: #{tpu_custom_call.1} parent=11 // pred_check_branch
          %360 = sbr.rel (%p358) target = $region52
        $region51: #{tpu_custom_call.1} parent=11 // pred_region
          _
        $region52: #{tpu_custom_call.1} parent=11 // pred_fallthru
          _
        // Predicated region
        $region53: #{tpu_custom_call.1} parent=11 // pred_check
          %p361 = pneg %p279
        $region54: #{tpu_custom_call.1} parent=11 // pred_check_branch
          %363 = sbr.rel (%p361) target = $region56
        $region55: #{tpu_custom_call.1} parent=11 // pred_region
          _
        $region56: #{tpu_custom_call.1} parent=11 // pred_fallthru
          _
      $region12: #{tpu_custom_call.1} parent=5 // pred_fallthru
        _
      %p364 = scmp.lt.s32.totalorder %s22, 2
      // Predicated region
      $region57: #{tpu_custom_call.1} parent=5 // pred_check
        %p365 = pneg %p364
      $region58: #{tpu_custom_call.1} parent=5 // pred_check_branch
        %367 = sbr.rel (%p365) target = $region60
      $region59: #{tpu_custom_call.1} parent=5 // pred_region
        // Predicated region
        $region61: #{tpu_custom_call.1} parent=59 // pred_check
          %p368 = pneg %p42
        $region62: #{tpu_custom_call.1} parent=59 // pred_check_branch
          %370 = sbr.rel (%p368) target = $region64
        $region63: #{tpu_custom_call.1} parent=59 // pred_region
          %p371 = scmp.lt.s32.totalorder %s22, 1
          %s372 = scalar_select %p371, %s22, 1
          %s373 = smul.addr %s372, 8
          %s374 = scalar_lea.vmem %s0, %s373
        $region64: #{tpu_custom_call.1} parent=59 // pred_fallthru
          _
      $region60: #{tpu_custom_call.1} parent=5 // pred_fallthru
        _
      %p375 = scmp.le.s32.totalorder 1, %s22
      %p376 = scmp.lt.s32.totalorder %s22, 3
      %p377 = pnand %p375, %p376
      %p378 = pneg %p377
      // Predicated region
      $region65: #{tpu_custom_call.1} parent=5 // pred_check
        _
      $region66: #{tpu_custom_call.1} parent=5 // pred_check_branch
        %380 = sbr.rel (%p377) target = $region68
      $region67: #{tpu_custom_call.1} parent=5 // pred_region
        %s381 = ssub.s32 %s22, 1
        // Predicated region
        $region69: #{tpu_custom_call.1} parent=67 // pred_check
          %p382 = pneg %p174
        $region70: #{tpu_custom_call.1} parent=67 // pred_check_branch
          %384 = sbr.rel (%p382) target = $region72
        $region71: #{tpu_custom_call.1} parent=67 // pred_region
          %386 = dma.done [#allocation3], 256
        $region72: #{tpu_custom_call.1} parent=67 // pred_fallthru
          _
        %p387 = scmp.lt.s32.totalorder %s27, 1
        %s388 = scalar_select %p387, %s27, 1
        %s389 = smul.addr %s388, 8
        %s390 = scalar_lea.vmem %s0, %s389
        %p391 = pneg %p48
        %p392 = pneg %p45
        %p393 = pneg %p69
        %p394 = pneg %p66
        %p395 = pneg %p90
        %p396 = pneg %p87
        %p397 = pneg %p111
        %p398 = pneg %p108
        %p399 = pneg %p132
        %p400 = pneg %p129
        %p401 = pneg %p153
        %p402 = pneg %p150
        %p403 = pneg %p174
        %p404 = pneg %p171
        %p405 = pneg %p195
        %p406 = pneg %p192
        %p407 = pneg %p216
        %p408 = pneg %p213
        %p409 = pneg %p237
        %p410 = pneg %p234
        %p411 = pneg %p258
        %p412 = pneg %p255
        %p413 = pneg %p279
        %p414 = pneg %p276
        %p415 = pneg %p305
        %p416 = pneg %p302
        %s417 = sand.u32 %s292, 1
        %s418 = scalar_lea.sflag [#allocation4], %s417
        %s419 = sand.u32 %s292, 1
        %s420 = smul.addr %s419, 8
        %s421 = scalar_lea.vmem [#allocation5], %s420
        %p422 = scmp.lt.s32.totalorder %s27, 1
        %s423 = scalar_select %p422, %s27, 1
        %s424 = smul.addr %s423, 8
        %s425 = scalar_lea.vmem %s0, %s424
        %v427 = vld [vmem:[%s425] sm:$0xff]
        %v428 = vpack.c.bf16 %v427, %v427
        %v429 = vld [vmem:[%s1] sm:$0xf]
        %v430 = vld [vmem:[%s1 + $0x4] sm:$0xf]
        %v431 = vld [vmem:[%s1 + $0x8] sm:$0xf]
        %v432 = vld [vmem:[%s1 + $0xc] sm:$0xf]
        %v437 = vunpack.c.l.b16 %v429
        %v438 = vunpack.c.l.b16 %v430
        %v439 = vunpack.c.l.b16 %v431
        %v440 = vunpack.c.l.b16 %v432
        %v441 = vpack.c.b16 %v438, %v437
        %v442 = vpack.c.b16 %v440, %v439
        %vm445 = vcmask 261120
        %v447 = vsel %vm445, %v428, 0
        %449 = vmatpush.bf16.msra.mxu0 0
        %450 = vmatpush.bf16.msra.mxu0 0
        %451 = vmatpush.bf16.msra.mxu0 0
        %452 = vmatpush.bf16.msra.mxu0 0
        %453 = vmatpush.bf16.msra.mxu0 0
        %454 = vmatpush.bf16.msra.mxu0 0
        %455 = vmatpush.bf16.msra.mxu0 %v442
        %456 = vmatpush.bf16.msra.mxu0 %v441
        %457 = vmatmul.bf16.gmra.mxu0 %v447
        %v458 = vpop.f32.mrf.mxu0
        %v459 = vadd.f32 0.0, %v458
        %v460 = vpop.f32.mrf.mxu0
        %461 = vdwg.mxu0
        %v462 = vmul.f32 %v459, 0.35355338
        %v463 = vpack.c.bf16 %v462, %v462
        %v464 = vpack.c.bf16 %v459, %v459
        %v465 = vlaneseq
        %v466 = vshrl.u32 %v465, 7
        %v467 = vlaneseq
        %v468 = vand.u32 %v467, 127
        %vm469 = vcmp.gt.s32.totalorder %v468, %v466
        %v470 = vsel %vm469, -1e+30, 0.0
        %v471 = vld [vmem:[%s2] sm:$0xf]
        %v472 = vld [vmem:[%s2 + $0x4] sm:$0xf]
        %v473 = vld [vmem:[%s2 + $0x8] sm:$0xf]
        %v474 = vld [vmem:[%s2 + $0xc] sm:$0xf]
        %476 = vrot.lane.b32.xlu0 %v463, 120
        %v477 = vpop.permute.xlu0 %476
        %478 = vrot.lane.b32.xlu0 %v463, 112
        %v479 = vpop.permute.xlu0 %478
        %480 = vrot.lane.b32.xlu0 %v463, 104
        %v481 = vpop.permute.xlu0 %480
        %483 = vrot.lane.b32.xlu0 %v464, 120
        %v484 = vpop.permute.xlu0 %483
        %485 = vrot.lane.b32.xlu0 %v464, 112
        %v486 = vpop.permute.xlu0 %485
        %487 = vrot.lane.b32.xlu0 %v464, 104
        %v488 = vpop.permute.xlu0 %487
        %v489 = vunpack.c.l.b16 %v464
        %v490 = vpack.c.b16 %v489, %v489
        %491 = vrot.lane.b32.xlu0 %v490, 96
        %v492 = vpop.permute.xlu0 %491
        %vm493 = vcmask 64512
        %v495 = vsel %vm493, %v463, 0
        %v498 = vsel %vm493, %v492, 0
        %500 = vmatpush.bf16.xpose.msra.mxu0 0
        %501 = vmatpush.bf16.xpose.msra.mxu0 0
        %502 = vmatpush.bf16.xpose.msra.mxu0 0
        %503 = vmatpush.bf16.xpose.msra.mxu0 0
        %504 = vmatpush.bf16.xpose.msra.mxu0 0
        %505 = vmatpush.bf16.xpose.msra.mxu0 0
        %506 = vmatpush.bf16.xpose.msra.mxu0 0
        %507 = vmatpush.bf16.xpose.msra.mxu0 %v498
        %508 = vmatmul.bf16.gmra.mxu0 %v495
        %v509 = vpop.f32.mrf.mxu0
        %v510 = vadd.f32 %v470, %v509
        %v511 = vpop.f32.mrf.mxu0
        %512 = vdwg.mxu0
        %v513 = vunpack.c.l.b16 %v484
        %v514 = vpack.c.b16 %v513, %v513
        %515 = vrot.lane.b32.xlu0 %v514, 96
        %v516 = vpop.permute.xlu0 %515
        %v518 = vsel %vm493, %v477, 0
        %v521 = vsel %vm493, %v516, 0
        %523 = vmatpush.bf16.xpose.msra.mxu0 0
        %524 = vmatpush.bf16.xpose.msra.mxu0 0
        %525 = vmatpush.bf16.xpose.msra.mxu0 0
        %526 = vmatpush.bf16.xpose.msra.mxu0 0
        %527 = vmatpush.bf16.xpose.msra.mxu0 0
        %528 = vmatpush.bf16.xpose.msra.mxu0 0
        %529 = vmatpush.bf16.xpose.msra.mxu0 0
        %530 = vmatpush.bf16.xpose.msra.mxu0 %v521
        %531 = vmatmul.bf16.gmra.mxu0 %v518
        %v532 = vpop.f32.mrf.mxu0
        %v533 = vadd.f32 %v470, %v532
        %v534 = vpop.f32.mrf.mxu0
        %535 = vdwg.mxu0
        %v536 = vunpack.c.l.b16 %v486
        %v537 = vpack.c.b16 %v536, %v536
        %538 = vrot.lane.b32.xlu0 %v537, 96
        %v539 = vpop.permute.xlu0 %538
        %v541 = vsel %vm493, %v479, 0
        %v544 = vsel %vm493, %v539, 0
        %546 = vmatpush.bf16.xpose.msra.mxu0 0
        %547 = vmatpush.bf16.xpose.msra.mxu0 0
        %548 = vmatpush.bf16.xpose.msra.mxu0 0
        %549 = vmatpush.bf16.xpose.msra.mxu0 0
        %550 = vmatpush.bf16.xpose.msra.mxu0 0
        %551 = vmatpush.bf16.xpose.msra.mxu0 0
        %552 = vmatpush.bf16.xpose.msra.mxu0 0
        %553 = vmatpush.bf16.xpose.msra.mxu0 %v544
        %554 = vmatmul.bf16.gmra.mxu0 %v541
        %v555 = vpop.f32.mrf.mxu0
        %v556 = vadd.f32 %v470, %v555
        %v557 = vpop.f32.mrf.mxu0
        %558 = vdwg.mxu0
        %v559 = vunpack.c.l.b16 %v488
        %v560 = vpack.c.b16 %v559, %v559
        %561 = vrot.lane.b32.xlu0 %v560, 96
        %v562 = vpop.permute.xlu0 %561
        %v564 = vsel %vm493, %v481, 0
        %v567 = vsel %vm493, %v562, 0
        %569 = vmatpush.bf16.xpose.msra.mxu0 0
        %570 = vmatpush.bf16.xpose.msra.mxu0 0
        %571 = vmatpush.bf16.xpose.msra.mxu0 0
        %572 = vmatpush.bf16.xpose.msra.mxu0 0
        %573 = vmatpush.bf16.xpose.msra.mxu0 0
        %574 = vmatpush.bf16.xpose.msra.mxu0 0
        %575 = vmatpush.bf16.xpose.msra.mxu0 0
        %576 = vmatpush.bf16.xpose.msra.mxu0 %v567
        %577 = vmatmul.bf16.gmra.mxu0 %v564
        %v578 = vpop.f32.mrf.mxu0
        %v579 = vadd.f32 %v470, %v578
        %v580 = vpop.f32.mrf.mxu0
        %581 = vdwg.mxu0
        %v582 = vsel %vm493, %v510, -inf
        %583 = vmax.xlane.f32.xlu0 %v582
        %v584 = vpop.xlane.xlu0 %583
        %v585 = vsel %vm493, %v533, -inf
        %586 = vmax.xlane.f32.xlu0 %v585
        %v587 = vpop.xlane.xlu0 %586
        %v588 = vsel %vm493, %v556, -inf
        %589 = vmax.xlane.f32.xlu0 %v588
        %v590 = vpop.xlane.xlu0 %589
        %v591 = vsel %vm493, %v579, -inf
        %592 = vmax.xlane.f32.xlu0 %v591
        %v593 = vpop.xlane.xlu0 %592
        %v594 = vsub.f32 %v510, %v584
        %v595 = vsub.f32 %v533, %v587
        %v596 = vsub.f32 %v556, %v590
        %v597 = vsub.f32 %v579, %v593
        %v598 = vmul.f32 %v594, 1.442695
        %v599 = vpow.pop %v598
        %v600 = vmul.f32 %v595, 1.442695
        %v601 = vpow.pop %v600
        %v602 = vmul.f32 %v596, 1.442695
        %v603 = vpow.pop %v602
        %v604 = vmul.f32 %v597, 1.442695
        %v605 = vpow.pop %v604
        %v606 = vsel %vm493, %v599, 0.0
        %607 = vadd.xlane.f32.xlu0 %v606
        %v608 = vpop.xlane.xlu0 %607
        %v609 = vsel %vm493, %v601, 0.0
        %610 = vadd.xlane.f32.xlu0 %v609
        %v611 = vpop.xlane.xlu0 %610
        %v612 = vsel %vm493, %v603, 0.0
        %613 = vadd.xlane.f32.xlu0 %v612
        %v614 = vpop.xlane.xlu0 %613
        %v615 = vsel %vm493, %v605, 0.0
        %616 = vadd.xlane.f32.xlu0 %v615
        %v617 = vpop.xlane.xlu0 %616
        %v618 = vrcp.pop %v608
        %v619 = vrcp.pop %v611
        %v620 = vrcp.pop %v614
        %v621 = vrcp.pop %v617
        %v622 = vmul.f32 %v599, %v618
        %v623 = vmul.f32 %v601, %v619
        %v624 = vmul.f32 %v603, %v620
        %v625 = vmul.f32 %v605, %v621
        %v626 = vpack.c.bf16 %v622, %v622
        %v627 = vpack.c.bf16 %v623, %v623
        %v628 = vpack.c.bf16 %v624, %v624
        %v629 = vpack.c.bf16 %v625, %v625
        %630 = vrot.lane.b32.xlu0 %v490, 64
        %v631 = vpop.permute.xlu0 %630
        %v633 = vsel %vm493, %v626, 0
        %vm635 = vcmask 1043456
        %v637 = vsel %vm635, %v631, 0
        %639 = vmatpush.bf16.msra.mxu0 0
        %640 = vmatpush.bf16.msra.mxu0 0
        %641 = vmatpush.bf16.msra.mxu0 0
        %642 = vmatpush.bf16.msra.mxu0 0
        %643 = vmatpush.bf16.msra.mxu0 0
        %644 = vmatpush.bf16.msra.mxu0 0
        %645 = vmatpush.bf16.msra.mxu0 0
        %646 = vmatpush.bf16.msra.mxu0 %v637
        %647 = vmatmul.bf16.gmra.mxu0 %v633
        %v648 = vpop.f32.mrf.mxu0
        %v649 = vadd.f32 0.0, %v648
        %v650 = vpop.f32.mrf.mxu0
        %651 = vdwg.mxu0
        %652 = vrot.lane.b32.xlu0 %v514, 64
        %v653 = vpop.permute.xlu0 %652
        %v655 = vsel %vm493, %v627, 0
        %v658 = vsel %vm635, %v653, 0
        %660 = vmatpush.bf16.msra.mxu0 0
        %661 = vmatpush.bf16.msra.mxu0 0
        %662 = vmatpush.bf16.msra.mxu0 0
        %663 = vmatpush.bf16.msra.mxu0 0
        %664 = vmatpush.bf16.msra.mxu0 0
        %665 = vmatpush.bf16.msra.mxu0 0
        %666 = vmatpush.bf16.msra.mxu0 0
        %667 = vmatpush.bf16.msra.mxu0 %v658
        %668 = vmatmul.bf16.gmra.mxu0 %v655
        %v669 = vpop.f32.mrf.mxu0
        %v670 = vadd.f32 0.0, %v669
        %v671 = vpop.f32.mrf.mxu0
        %672 = vdwg.mxu0
        %673 = vrot.lane.b32.xlu0 %v537, 64
        %v674 = vpop.permute.xlu0 %673
        %v676 = vsel %vm493, %v628, 0
        %v679 = vsel %vm635, %v674, 0
        %681 = vmatpush.bf16.msra.mxu0 0
        %682 = vmatpush.bf16.msra.mxu0 0
        %683 = vmatpush.bf16.msra.mxu0 0
        %684 = vmatpush.bf16.msra.mxu0 0
        %685 = vmatpush.bf16.msra.mxu0 0
        %686 = vmatpush.bf16.msra.mxu0 0
        %687 = vmatpush.bf16.msra.mxu0 0
        %688 = vmatpush.bf16.msra.mxu0 %v679
        %689 = vmatmul.bf16.gmra.mxu0 %v676
        %v690 = vpop.f32.mrf.mxu0
        %v691 = vadd.f32 0.0, %v690
        %v692 = vpop.f32.mrf.mxu0
        %693 = vdwg.mxu0
        %694 = vrot.lane.b32.xlu0 %v560, 64
        %v695 = vpop.permute.xlu0 %694
        %v697 = vsel %vm493, %v629, 0
        %v700 = vsel %vm635, %v695, 0
        %702 = vmatpush.bf16.msra.mxu0 0
        %703 = vmatpush.bf16.msra.mxu0 0
        %704 = vmatpush.bf16.msra.mxu0 0
        %705 = vmatpush.bf16.msra.mxu0 0
        %706 = vmatpush.bf16.msra.mxu0 0
        %707 = vmatpush.bf16.msra.mxu0 0
        %708 = vmatpush.bf16.msra.mxu0 0
        %709 = vmatpush.bf16.msra.mxu0 %v700
        %710 = vmatmul.bf16.gmra.mxu0 %v697
        %v711 = vpop.f32.mrf.mxu0
        %v712 = vadd.f32 0.0, %v711
        %v713 = vpop.f32.mrf.mxu0
        %714 = vdwg.mxu0
        %v715 = vpack.c.bf16 %v649, %v649
        %v716 = vpack.c.bf16 %v670, %v670
        %v717 = vpack.c.bf16 %v691, %v691
        %v718 = vpack.c.bf16 %v712, %v712
        %v720 = vsel %vm493, %v716, 0
        %v723 = vsel %vm635, %v472, 0
        %725 = vmatpush.bf16.msra.mxu0 0
        %726 = vmatpush.bf16.msra.mxu0 0
        %727 = vmatpush.bf16.msra.mxu0 0
        %728 = vmatpush.bf16.msra.mxu0 0
        %729 = vmatpush.bf16.msra.mxu0 0
        %730 = vmatpush.bf16.msra.mxu0 0
        %731 = vmatpush.bf16.msra.mxu0 0
        %732 = vmatpush.bf16.msra.mxu0 %v723
        %733 = vmatmul.bf16.gmra.mxu0 %v720
        %v734 = vpop.f32.mrf.mxu0
        %v735 = vadd.f32 0.0, %v734
        %v736 = vpop.f32.mrf.mxu0
        %737 = vdwg.mxu0
        %v739 = vsel %vm493, %v715, 0
        %v742 = vsel %vm635, %v471, 0
        %744 = vmatpush.bf16.msra.mxu0 0
        %745 = vmatpush.bf16.msra.mxu0 0
        %746 = vmatpush.bf16.msra.mxu0 0
        %747 = vmatpush.bf16.msra.mxu0 0
        %748 = vmatpush.bf16.msra.mxu0 0
        %749 = vmatpush.bf16.msra.mxu0 0
        %750 = vmatpush.bf16.msra.mxu0 0
        %751 = vmatpush.bf16.msra.mxu0 %v742
        %752 = vmatmul.bf16.gmra.mxu0 %v739
        %v753 = vpop.f32.mrf.mxu0
        %v754 = vadd.f32 %v735, %v753
        %v755 = vpop.f32.mrf.mxu0
        %756 = vdwg.mxu0
        %v758 = vsel %vm493, %v717, 0
        %v761 = vsel %vm635, %v473, 0
        %763 = vmatpush.bf16.msra.mxu0 0
        %764 = vmatpush.bf16.msra.mxu0 0
        %765 = vmatpush.bf16.msra.mxu0 0
        %766 = vmatpush.bf16.msra.mxu0 0
        %767 = vmatpush.bf16.msra.mxu0 0
        %768 = vmatpush.bf16.msra.mxu0 0
        %769 = vmatpush.bf16.msra.mxu0 0
        %770 = vmatpush.bf16.msra.mxu0 %v761
        %771 = vmatmul.bf16.gmra.mxu0 %v758
        %v772 = vpop.f32.mrf.mxu0
        %v773 = vadd.f32 0.0, %v772
        %v774 = vpop.f32.mrf.mxu0
        %775 = vdwg.mxu0
        %v776 = vadd.f32 %v754, %v773
        %v778 = vsel %vm493, %v718, 0
        %v781 = vsel %vm635, %v474, 0
        %783 = vmatpush.bf16.msra.mxu0 0
        %784 = vmatpush.bf16.msra.mxu0 0
        %785 = vmatpush.bf16.msra.mxu0 0
        %786 = vmatpush.bf16.msra.mxu0 0
        %787 = vmatpush.bf16.msra.mxu0 0
        %788 = vmatpush.bf16.msra.mxu0 0
        %789 = vmatpush.bf16.msra.mxu0 0
        %790 = vmatpush.bf16.msra.mxu0 %v781
        %791 = vmatmul.bf16.gmra.mxu0 %v778
        %v792 = vpop.f32.mrf.mxu0
        %v793 = vadd.f32 0.0, %v792
        %v794 = vpop.f32.mrf.mxu0
        %795 = vdwg.mxu0
        %v796 = vadd.f32 %v776, %v793
        %v797 = vld [vmem:[%s3] sm:$0x1]
        %v799 = vperm.slane %v797, 0
        %v801 = vadd.f32 %v796, %v799
        %v802 = vadd.f32 %v427, %v801
        %v803 = vsel %vm445, %v802, 0.0
        %804 = vadd.xlane.f32.xlu0 %v803
        %v805 = vpop.xlane.xlu0 %804
        %v806 = vrcp.pop 32.0
        %v807 = vmul.f32 32.0, %v806
        %v808 = vsub.f32 1.0, %v807
        %v809 = vmul.f32 %v806, %v808
        %v810 = vadd.f32 %v806, %v809
        %vm811 = vweird.f32 %v806
        %v812 = vsel %vm811, %v806, %v810
        %v813 = vmul.f32 %v805, %v812
        %v814 = vsub.f32 %v802, %v813
        %v815 = vmul.f32 %v814, %v814
        %v816 = vsel %vm445, %v815, 0.0
        %817 = vadd.xlane.f32.xlu0 %v816
        %v818 = vpop.xlane.xlu0 %817
        %v819 = vmul.f32 %v818, %v812
        %v820 = vadd.f32 %v819, 1e-05
        %v821 = vrsqrt.pop %v820
        %v822 = vmul.f32 %v821, %v820
        %v823 = vmul.f32 %v822, %v821
        %v824 = vmul.f32 0.5, %v823
        %v825 = vsub.f32 1.5, %v824
        %v826 = vmul.f32 %v821, %v825
        %vm827 = vweird.f32 %v820
        %vm828 = vweird.f32 %v821
        %vm829 = vmor %vm827, %vm828
        %v830 = vsel %vm829, %v821, %v826
        %v831 = vmul.f32 %v814, %v830
        %v832 = vld [vmem:[%s4] sm:$0x1]
        %v834 = vperm.slane %v832, 0
        %v836 = vmul.f32 %v831, %v834
        %v837 = vld [vmem:[%s5] sm:$0x1]
        %v839 = vperm.slane %v837, 0
        %v841 = vadd.f32 %v836, %v839
        %v842 = vpack.c.bf16 %v841, %v841
        %v843 = vld [vmem:[#allocation2] sm:$0xf]
        %v844 = vld [vmem:[#allocation2 + $0x4] sm:$0xf]
        %v845 = vld [vmem:[#allocation2 + $0x8] sm:$0xf]
        %v846 = vld [vmem:[#allocation2 + $0xc] sm:$0xf]
        %v847 = vld [vmem:[%s7] sm:$0x1]
        %v849 = vperm.slane %v847, 0
        %v855 = vunpack.c.l.b16 %v843
        %v856 = vunpack.c.l.b16 %v844
        %v857 = vunpack.c.l.b16 %v845
        %v858 = vunpack.c.l.b16 %v846
        %v859 = vpack.c.b16 %v856, %v855
        %v860 = vpack.c.b16 %v858, %v857
        %v864 = vsel %vm445, %v842, 0
        %866 = vmatpush.bf16.msra.mxu0 0
        %867 = vmatpush.bf16.msra.mxu0 0
        %868 = vmatpush.bf16.msra.mxu0 0
        %869 = vmatpush.bf16.msra.mxu0 0
        %870 = vmatpush.bf16.msra.mxu0 0
        %871 = vmatpush.bf16.msra.mxu0 0
        %872 = vmatpush.bf16.msra.mxu0 %v860
        %873 = vmatpush.bf16.msra.mxu0 %v859
        %874 = vmatmul.bf16.gmra.mxu0 %v864
        %v875 = vpop.f32.mrf.mxu0
        %v876 = vadd.f32 %v849, %v875
        %v877 = vpop.f32.mrf.mxu0
        %878 = vdwg.mxu0
        %v879 = vmul.f32 %v876, 0.5
        %v880 = vmul.f32 %v876, 0.044715
        %v881 = vmul.f32 %v880, %v876
        %v882 = vmul.f32 %v881, %v876
        %v883 = vadd.f32 %v876, %v882
        %v884 = vmul.f32 %v883, 0.7978846
        %v885 = vtanh.pop %v884
        %v886 = vadd.f32 %v885, 1.0
        %v887 = vmul.f32 %v879, %v886
        %v888 = vpack.c.bf16 %v887, %v887
        %v889 = vld [vmem:[%s8] sm:$0xf]
        %v890 = vld [vmem:[%s8 + $0x4] sm:$0xf]
        %v891 = vld [vmem:[%s8 + $0x8] sm:$0xf]
        %v892 = vld [vmem:[%s8 + $0xc] sm:$0xf]
        %v893 = vld [vmem:[%s8 + $0x10] sm:$0xf]
        %v894 = vld [vmem:[%s8 + $0x14] sm:$0xf]
        %v895 = vld [vmem:[%s8 + $0x18] sm:$0xf]
        %v896 = vld [vmem:[%s8 + $0x1c] sm:$0xf]
        %v897 = vld [vmem:[%s9] sm:$0x1]
        %v899 = vperm.slane %v897, 0
        %v909 = vunpack.c.l.b16 %v889
        %v910 = vunpack.c.l.b16 %v890
        %v911 = vunpack.c.l.b16 %v891
        %v912 = vunpack.c.l.b16 %v892
        %v913 = vunpack.c.l.b16 %v893
        %v914 = vunpack.c.l.b16 %v894
        %v915 = vunpack.c.l.b16 %v895
        %v916 = vunpack.c.l.b16 %v896
        %v917 = vpack.c.b16 %v910, %v909
        %v918 = vpack.c.b16 %v912, %v911
        %v919 = vpack.c.b16 %v914, %v913
        %v920 = vpack.c.b16 %v916, %v915
        %vm925 = vcmask 523264
        %v927 = vsel %vm925, %v888, 0
        %929 = vmatpush.bf16.msra.mxu0 0
        %930 = vmatpush.bf16.msra.mxu0 0
        %931 = vmatpush.bf16.msra.mxu0 0
        %932 = vmatpush.bf16.msra.mxu0 0
        %933 = vmatpush.bf16.msra.mxu0 %v920
        %934 = vmatpush.bf16.msra.mxu0 %v919
        %935 = vmatpush.bf16.msra.mxu0 %v918
        %936 = vmatpush.bf16.msra.mxu0 %v917
        %937 = vmatmul.bf16.gmra.mxu0 %v927
        %v938 = vpop.f32.mrf.mxu0
        %v939 = vadd.f32 %v899, %v938
        %v940 = vpop.f32.mrf.mxu0
        %941 = vdwg.mxu0
        %v942 = vadd.f32 %v841, %v939
        %v943 = vsel %vm445, %v942, 0.0
        %944 = vadd.xlane.f32.xlu0 %v943
        %v945 = vpop.xlane.xlu0 %944
        %v946 = vmul.f32 %v945, %v812
        %v947 = vsub.f32 %v942, %v946
        %v948 = vmul.f32 %v947, %v947
        %v949 = vsel %vm445, %v948, 0.0
        %950 = vadd.xlane.f32.xlu0 %v949
        %v951 = vpop.xlane.xlu0 %950
        %v952 = vmul.f32 %v951, %v812
        %v953 = vadd.f32 %v952, 1e-05
        %v954 = vrsqrt.pop %v953
        %v955 = vmul.f32 %v954, %v953
        %v956 = vmul.f32 %v955, %v954
        %v957 = vmul.f32 0.5, %v956
        %v958 = vsub.f32 1.5, %v957
        %v959 = vmul.f32 %v954, %v958
        %vm960 = vweird.f32 %v953
        %vm961 = vweird.f32 %v954
        %vm962 = vmor %vm960, %vm961
        %v963 = vsel %vm962, %v954, %v959
        %v964 = vmul.f32 %v947, %v963
        %v965 = vld [vmem:[%s10] sm:$0x1]
        %v967 = vperm.slane %v965, 0
        %v969 = vmul.f32 %v964, %v967
        %v970 = vld [vmem:[%s11] sm:$0x1]
        %v972 = vperm.slane %v970, 0
        %v974 = vadd.f32 %v969, %v972
        %975 = vst.msk [vmem:[%s421] sm:$0xff] %vm445, %v974
        %s976 = sand.u32 %s292, 1
        %s977 = scalar_lea.sflag [#allocation4], %s976
        %s978 = sand.u32 %s292, 1
        %s979 = smul.addr %s978, 8
        %s980 = scalar_lea.vmem [#allocation5], %s979
        // Predicated region
        $region73: #{tpu_custom_call.1} parent=67 // pred_check
          %p981 = pneg %p302
        $region74: #{tpu_custom_call.1} parent=67 // pred_check_branch
          %983 = sbr.rel (%p981) target = $region76
        $region75: #{tpu_custom_call.1} parent=67 // pred_region
          %985 = vsyncadd %s977, 0
          %s986 = smul.addr %s27, 8
          %s987 = scalar_lea.hbm %s12, %s986
          %s989 = sshll.u32 %s980, 4
          %s990 = int_to_ptr.vmem [resolvable:$true] %s989
          %s991 = sshll.u32 %s987, 4
          %s992 = int_to_ptr.hbm [resolvable:$true] %s991
          %994 = dma.vmem_to_hbm [thread:$0]  %s990, 128, %s992, %s977
        $region76: #{tpu_custom_call.1} parent=67 // pred_fallthru
          _
      $region68: #{tpu_custom_call.1} parent=5 // pred_fallthru
        _
      %p995 = scmp.le.s32.totalorder 2, %s22
      // Predicated region
      $region77: #{tpu_custom_call.1} parent=5 // pred_check
        %p996 = pneg %p995
      $region78: #{tpu_custom_call.1} parent=5 // pred_check_branch
        %998 = sbr.rel (%p996) target = $region80
      $region79: #{tpu_custom_call.1} parent=5 // pred_region
        %s999 = ssub.s32 %s22, 2
        // Predicated region
        $region81: #{tpu_custom_call.1} parent=79 // pred_check
          %p1000 = pneg %p308
        $region82: #{tpu_custom_call.1} parent=79 // pred_check_branch
          %1002 = sbr.rel (%p1000) target = $region84
        $region83: #{tpu_custom_call.1} parent=79 // pred_region
          %s1003 = sand.u32 %s293, 1
          %s1004 = scalar_lea.sflag [#allocation4], %s1003
          %s1005 = sand.u32 %s293, 1
          %s1006 = smul.addr %s1005, 8
          %s1007 = scalar_lea.vmem [#allocation5], %s1006
          %1009 = dma.done %s1004, 128
        $region84: #{tpu_custom_call.1} parent=79 // pred_fallthru
          _
      $region80: #{tpu_custom_call.1} parent=5 // pred_fallthru
        _
    $region6: #{tpu_custom_call.1} parent=1 // loop_footer
      %s26 = sadd.s32 1, %s22
    $region7: #{tpu_custom_call.1} parent=1 // loop_footer_branch
      %21 = sbr.rel target = $region3
    $region8: #{tpu_custom_call.1} parent=1 // loop_exit
      _
    %1010 = vsyncpa [#allocation3], 1
    %s1011 = scalar_lea.sflag [#allocation3], 1
    %1012 = vsyncpa %s1011, 1
    %1013 = vsyncpa [#allocation4], 1
    %s1014 = scalar_lea.sflag [#allocation4], 1
    %1015 = vsyncpa %s1014, 1

</llo_original>
